<compile_context>
chip_gen: v5e
topology: v5e:2x2
jax: 0.10.0
libtpu: 0.0.40
codegen_flags: <defaults>
</compile_context>

<pallas_src>
from functools import partial

import jax
import jax.numpy as jnp
from jax.experimental import pallas as pl
from jax.experimental.pallas import tpu as pltpu

MARGIN = 1.0          # config.margin
MULTIPLE_AHML = 1.0   # config.Multiple_AHML
MUL_MSN = 1.0         # config.Mul_MSN


def _ahcl_kernel(adj_ref, xr_ref, x_ref, mu_ref, lv_ref,
                 y_ref, loss_ref, mse_acc_ref, *,
                 batch, margin, mult_ahml, mul_msn):
    k = pl.program_id(0)

    @pl.when(k == 0)
    def _init():
        mse_acc_ref[0, 0] = 0.0

    # MSE partial sum over this feature tile.  Inputs stay in their native
    # dtype in HBM/VMEM; cast to f32 in-vreg and accumulate in f32.
    diff = xr_ref[...].astype(jnp.float32) - x_ref[...].astype(jnp.float32)
    mse_acc_ref[0, 0] += jnp.sum(diff * diff)

    @pl.when(k == pl.num_programs(0) - 1)
    def _finalize():
        adj = adj_ref[...]

        # f = Adj^2 ; g = clamp(margin - Adj, min=1e-8)^2
        f = adj * adj
        gc = jnp.maximum(margin - adj, 1e-8)
        g = gc * gc
        y0 = g / (f + g)           # single divide per element
        w = 1.0 - y0               # == f / (f + g), no second divide

        # Y = max(Y, Y^T) computed in-kernel (no extra HBM input for Adj^T).
        y = jnp.maximum(y0, y0.T)
        y_ref[...] = y
        # TODO(synk): torch.no_grad() around Y only affects autodiff; forward values identical.

        # loss_contrastive = Multiple_AHML * mean(Y*f + (1-Y)*g) + 1e-5 * ||w||_F
        contrastive = (mult_ahml * jnp.mean(y * f + (1.0 - y) * g)
                       + 1e-5 * jnp.sqrt(jnp.sum(w * w)))

        # loss_decoder: MSE (sum-reduced, / batch) + KLD
        mse = mul_msn * mse_acc_ref[0, 0] / batch
        mu = mu_ref[...]
        lv = lv_ref[...]
        kld = -0.05 * jnp.mean(1.0 + lv - mu * mu - jnp.exp(lv))

        loss_ref[0, 0] = contrastive + mse + kld


def _pick_feature_tile(batch, chw, itemsize,
                       target_bytes=4 << 20, max_tile=8192):
    """Largest 128-multiple tile whose (B, tile) block stays under ~4 MiB
    (so 2 inputs x 2 pipeline buffers fit comfortably in v7x's 64 MiB VMEM)."""
    t = (target_bytes // max(1, batch * itemsize)) // 128 * 128
    t = min(t, max_tile, pl.cdiv(chw, 128) * 128)
    return max(int(t), 128)


def ahcl_forward(x_reconstruction, x, adj, mu, logvar,
                 margin=MARGIN, mult_ahml=MULTIPLE_AHML, mul_msn=MUL_MSN,
                 feature_tile=None):
    b = x.shape[0]
    # Flatten NCHW -> [B, C*H*W] (pure glue).  NO dtype cast here: the big
    # tensors travel in their native dtype and are cast in-kernel.
    xr2 = x_reconstruction.reshape(b, -1)
    x2 = x.reshape(b, -1)
    adj = adj.astype(jnp.float32)
    mu = mu.astype(jnp.float32)
    logvar = logvar.astype(jnp.float32)

    n = adj.shape[0]
    chw = x2.shape[1]
    ell = mu.shape[1]
    itemsize = jnp.dtype(x2.dtype).itemsize

    if feature_tile is None:
        feature_tile = _pick_feature_tile(b, chw, itemsize)
    feature_tile = min(int(feature_tile), pl.cdiv(chw, 128) * 128)
    feature_tile = max(128, (feature_tile // 128) * 128)

    # Pad the feature axis to a tile multiple with zeros (zero diff => no MSE
    # contribution), so the last block is full-size.
    chw_p = pl.cdiv(chw, feature_tile) * feature_tile
    if chw_p != chw:
        pad = ((0, 0), (0, chw_p - chw))
        xr2 = jnp.pad(xr2, pad)
        x2 = jnp.pad(x2, pad)
    num_tiles = chw_p // feature_tile

    kernel = partial(_ahcl_kernel, batch=float(b), margin=float(margin),
                     mult_ahml=float(mult_ahml), mul_msn=float(mul_msn))

    cost = pl.CostEstimate(
        flops=3 * b * chw + 12 * n * n + 6 * b * ell,
        transcendentals=b * ell + 1,
        bytes_accessed=2 * b * chw * itemsize + 2 * n * n * 4 + 2 * b * ell * 4 + 4,
    )

    # NOTE: Y is [B, B]; at B=8 its stores are masked (lane dim < 128).  If B
    # ever grows, keep it a multiple of 128 (or pad) for lane-dense writeback.
    y, loss = pl.pallas_call(
        kernel,
        grid=(num_tiles,),
        in_specs=[
            pl.BlockSpec((n, n), lambda k: (0, 0)),              # Adj (resident)
            pl.BlockSpec((b, feature_tile), lambda k: (0, k)),   # x_reconstruction tile
            pl.BlockSpec((b, feature_tile), lambda k: (0, k)),   # x tile
            pl.BlockSpec((b, ell), lambda k: (0, 0)),            # mu
            pl.BlockSpec((b, ell), lambda k: (0, 0)),            # logvar
        ],
        out_specs=(
            pl.BlockSpec((n, n), lambda k: (0, 0)),              # Y
            pl.BlockSpec((1, 1), lambda k: (0, 0),
                         memory_space=pltpu.MemorySpace.SMEM),   # scalar loss
        ),
        out_shape=(jax.ShapeDtypeStruct((n, n), jnp.float32),
                   jax.ShapeDtypeStruct((1, 1), jnp.float32)),
        scratch_shapes=[pltpu.SMEM((1, 1), jnp.float32)],        # MSE accumulator
        compiler_params=pltpu.CompilerParams(
            dimension_semantics=("arbitrary",),                  # reduction axis
            vmem_limit_bytes=32 * 1024 * 1024),
        cost_estimate=cost,
    )(adj, xr2, x2, mu, logvar)
    # TODO(synk): on v7x the feature axis could additionally be split into an
    # outer "parallel" dim (per-TC partial MSE sums combined in the wrapper).
    return loss[0, 0], y


def ahcl_reference(x_reconstruction, x, adj, mu, logvar,
                   margin=MARGIN, mult_ahml=MULTIPLE_AHML, mul_msn=MUL_MSN):
    """Pure-JAX reference mirroring the PyTorch forward."""
    b = x.shape[0]
    x = x.astype(jnp.float32)
    x_reconstruction = x_reconstruction.astype(jnp.float32)
    f = adj ** 2
    g = jnp.maximum(margin - adj, 1e-8) ** 2
    w = f / (f + g)
    y = g / (f + g)
    y = jnp.maximum(y, y.T)
    loss_contrastive = (mult_ahml * jnp.mean(y * f + (1.0 - y) * g)
                        + 1e-5 * jnp.sqrt(jnp.sum(w * w)))
    mse = mul_msn * jnp.sum((x_reconstruction - x) ** 2) / b
    kld = -0.05 * jnp.mean(1.0 + logvar - mu ** 2 - jnp.exp(logvar))
    return loss_contrastive + mse + kld, y


if __name__ == "__main__":
    key = jax.random.PRNGKey(0)
    kx, kxr, kadj, kmu, klv = jax.random.split(key, 5)

    B, C, H, W, L = 8, 4, 16, 16, 32
    x = jax.random.normal(kx, (B, C, H, W), dtype=jnp.float32)          # NCHW
    x_recon = x + 0.1 * jax.random.normal(kxr, (B, C, H, W), dtype=jnp.float32)
    adj = jax.random.uniform(kadj, (B, B), dtype=jnp.float32, minval=0.0, maxval=2.0)
    mu = 0.5 * jax.random.normal(kmu, (B, L), dtype=jnp.float32)
    logvar = 0.1 * jax.random.normal(klv, (B, L), dtype=jnp.float32)

    # feature_tile=256 -> 4 pipelined grid steps over the 1024-wide feature axis
    # (exercises the init / accumulate / finalize path).
    loss, Y = ahcl_forward(x_recon, x, adj, mu, logvar, feature_tile=256)
    loss = jax.block_until_ready(loss)
    Y = jax.block_until_ready(Y)

    loss_ref, Y_ref = ahcl_reference(
        x_recon.reshape(B, -1), x.reshape(B, -1), adj, mu, logvar)

    assert jnp.allclose(loss, loss_ref, rtol=1e-5, atol=1e-5), (loss, loss_ref)
    assert jnp.allclose(Y, Y_ref, rtol=1e-6, atol=1e-6)
    print("KERNEL_OK")
</pallas_src>

<mosaic_0001>
module attributes {stable_mosaic.version = 11 : i64} {
  func.func @_ahcl_kernel(%arg0: i32, %arg1: memref<8x8xf32, #tpu.memory_space<vmem>>, %arg2: memref<8x256xf32, #tpu.memory_space<vmem>>, %arg3: memref<8x256xf32, #tpu.memory_space<vmem>>, %arg4: memref<8x32xf32, #tpu.memory_space<vmem>>, %arg5: memref<8x32xf32, #tpu.memory_space<vmem>>, %arg6: memref<8x8xf32, #tpu.memory_space<vmem>>, %arg7: memref<1x1xf32, #tpu.memory_space<smem>>, %arg8: memref<1x1xf32, #tpu.memory_space<smem>>) attributes {dimension_semantics = [#tpu.dimension_semantics<arbitrary>], iteration_bounds = array<i64: 4>, scalar_prefetch = 0 : i64, scratch_operands = 1 : i64, tpu.core_type = #tpu.core_type<tc>, window_params = [{pipeline_mode = #tpu.pipeline_mode<synchronous>, transform_indices = @transform_0, window_bounds = array<i64: 8, 8>}, {transform_indices = @transform_1, window_bounds = array<i64: 8, 256>}, {transform_indices = @transform_2, window_bounds = array<i64: 8, 256>}, {pipeline_mode = #tpu.pipeline_mode<synchronous>, transform_indices = @transform_3, window_bounds = array<i64: 8, 32>}, {pipeline_mode = #tpu.pipeline_mode<synchronous>, transform_indices = @transform_4, window_bounds = array<i64: 8, 32>}, {pipeline_mode = #tpu.pipeline_mode<synchronous>, transform_indices = @transform_5, window_bounds = array<i64: 8, 8>}, {transform_indices = @transform_6, window_bounds = array<i64: 1, 1>}]} {
    %c0_i32 = arith.constant 0 : i32
    %0 = arith.cmpi eq, %arg0, %c0_i32 : i32
    %1 = arith.extui %0 : i1 to i32
    %c0_i32_0 = arith.constant 0 : i32
    %2 = arith.cmpi ne, %1, %c0_i32_0 : i32
    scf.if %2 {
      %cst_9 = arith.constant 0.000000e+00 : f32
      %c0_10 = arith.constant 0 : index
      %c0_11 = arith.constant 0 : index
      %17 = memref.load %arg8[%c0_10, %c0_11] : memref<1x1xf32, #tpu.memory_space<smem>>
      memref.store %cst_9, %arg8[%c0_10, %c0_11] : memref<1x1xf32, #tpu.memory_space<smem>>
    } else {
    }
    %c0 = arith.constant 0 : index
    %c0_1 = arith.constant 0 : index
    %3 = vector.load %arg2[%c0, %c0_1] : memref<8x256xf32, #tpu.memory_space<vmem>>, vector<8x256xf32>
    %c0_2 = arith.constant 0 : index
    %c0_3 = arith.constant 0 : index
    %4 = vector.load %arg3[%c0_2, %c0_3] : memref<8x256xf32, #tpu.memory_space<vmem>>, vector<8x256xf32>
    %5 = arith.subf %3, %4 : vector<8x256xf32>
    %c0_4 = arith.constant 0 : index
    %c0_5 = arith.constant 0 : index
    %6 = memref.load %arg8[%c0_4, %c0_5] : memref<1x1xf32, #tpu.memory_space<smem>>
    %7 = arith.mulf %5, %5 : vector<8x256xf32>
    %8 = vector.shape_cast %7 : vector<8x256xf32> to vector<1x8x256xf32>
    %cst = arith.constant dense<0.000000e+00> : vector<1xf32>
    %9 = vector.multi_reduction <add>, %8, %cst [1, 2] : vector<1x8x256xf32> to vector<1xf32>
    %10 = vector.shape_cast %9 : vector<1xf32> to vector<1x1x1xf32>
    %11 = vector.extract %10[0, 0, 0] : f32 from vector<1x1x1xf32>
    %12 = arith.addf %6, %11 : f32
    %c0_6 = arith.constant 0 : index
    %c0_7 = arith.constant 0 : index
    %13 = memref.load %arg8[%c0_6, %c0_7] : memref<1x1xf32, #tpu.memory_space<smem>>
    memref.store %12, %arg8[%c0_6, %c0_7] : memref<1x1xf32, #tpu.memory_space<smem>>
    %c3_i32 = arith.constant 3 : i32
    %14 = arith.cmpi eq, %arg0, %c3_i32 : i32
    %15 = arith.extui %14 : i1 to i32
    %c0_i32_8 = arith.constant 0 : i32
    %16 = arith.cmpi ne, %15, %c0_i32_8 : i32
    scf.if %16 {
      %c0_9 = arith.constant 0 : index
      %c0_10 = arith.constant 0 : index
      %17 = vector.load %arg1[%c0_9, %c0_10] : memref<8x8xf32, #tpu.memory_space<vmem>>, vector<8x8xf32>
      %18 = arith.mulf %17, %17 : vector<8x8xf32>
      %cst_11 = arith.constant 1.000000e+00 : f32
      %19 = vector.broadcast %cst_11 : f32 to vector<8x8xf32>
      %20 = arith.subf %19, %17 : vector<8x8xf32>
      %cst_12 = arith.constant 9.99999993E-9 : f32
      %21 = vector.broadcast %cst_12 : f32 to vector<8x8xf32>
      %22 = arith.maximumf %20, %21 : vector<8x8xf32>
      %23 = arith.mulf %22, %22 : vector<8x8xf32>
      %24 = arith.addf %18, %23 : vector<8x8xf32>
      %25 = arith.divf %23, %24 : vector<8x8xf32>
      %cst_13 = arith.constant 1.000000e+00 : f32
      %26 = vector.broadcast %cst_13 : f32 to vector<8x8xf32>
      %27 = arith.subf %26, %25 : vector<8x8xf32>
      %28 = tpu.transpose %25, [1, 0] : vector<8x8xf32> -> vector<8x8xf32>
      %29 = arith.maximumf %25, %28 : vector<8x8xf32>
      %c0_14 = arith.constant 0 : index
      %c0_15 = arith.constant 0 : index
      %30 = vector.load %arg6[%c0_14, %c0_15] : memref<8x8xf32, #tpu.memory_space<vmem>>, vector<8x8xf32>
      tpu.vector_store %arg6[%c0_14, %c0_15], %29 {strides = array<i32>} : memref<8x8xf32, #tpu.memory_space<vmem>>, vector<8x8xf32>,
      %31 = arith.mulf %29, %18 : vector<8x8xf32>
      %cst_16 = arith.constant 1.000000e+00 : f32
      %32 = vector.broadcast %cst_16 : f32 to vector<8x8xf32>
      %33 = arith.subf %32, %29 : vector<8x8xf32>
      %34 = arith.mulf %33, %23 : vector<8x8xf32>
      %35 = arith.addf %31, %34 : vector<8x8xf32>
      %36 = vector.shape_cast %35 : vector<8x8xf32> to vector<1x8x8xf32>
      %cst_17 = arith.constant dense<0.000000e+00> : vector<1xf32>
      %37 = vector.multi_reduction <add>, %36, %cst_17 [1, 2] : vector<1x8x8xf32> to vector<1xf32>
      %38 = vector.shape_cast %37 : vector<1xf32> to vector<1x1x1xf32>
      %39 = vector.extract %38[0, 0, 0] : f32 from vector<1x1x1xf32>
      %cst_18 = arith.constant 6.400000e+01 : f32
      %40 = arith.divf %39, %cst_18 : f32
      %cst_19 = arith.constant 1.000000e+00 : f32
      %41 = arith.mulf %cst_19, %40 : f32
      %42 = arith.mulf %27, %27 : vector<8x8xf32>
      %43 = vector.shape_cast %42 : vector<8x8xf32> to vector<1x8x8xf32>
      %cst_20 = arith.constant dense<0.000000e+00> : vector<1xf32>
      %44 = vector.multi_reduction <add>, %43, %cst_20 [1, 2] : vector<1x8x8xf32> to vector<1xf32>
      %45 = vector.shape_cast %44 : vector<1xf32> to vector<1x1x1xf32>
      %46 = vector.extract %45[0, 0, 0] : f32 from vector<1x1x1xf32>
      %47 = math.sqrt %46 : f32
      %cst_21 = arith.constant 9.99999974E-6 : f32
      %48 = arith.mulf %cst_21, %47 : f32
      %49 = arith.addf %41, %48 : f32
      %c0_22 = arith.constant 0 : index
      %c0_23 = arith.constant 0 : index
      %50 = memref.load %arg8[%c0_22, %c0_23] : memref<1x1xf32, #tpu.memory_space<smem>>
      %cst_24 = arith.constant 1.000000e+00 : f32
      %51 = arith.mulf %cst_24, %50 : f32
      %cst_25 = arith.constant 8.000000e+00 : f32
      %52 = arith.divf %51, %cst_25 : f32
      %c0_26 = arith.constant 0 : index
      %c0_27 = arith.constant 0 : index
      %53 = vector.load %arg4[%c0_26, %c0_27] : memref<8x32xf32, #tpu.memory_space<vmem>>, vector<8x32xf32>
      %c0_28 = arith.constant 0 : index
      %c0_29 = arith.constant 0 : index
      %54 = vector.load %arg5[%c0_28, %c0_29] : memref<8x32xf32, #tpu.memory_space<vmem>>, vector<8x32xf32>
      %cst_30 = arith.constant 1.000000e+00 : f32
      %55 = vector.broadcast %cst_30 : f32 to vector<8x32xf32>
      %56 = arith.addf %55, %54 : vector<8x32xf32>
      %57 = arith.mulf %53, %53 : vector<8x32xf32>
      %58 = arith.subf %56, %57 : vector<8x32xf32>
      %59 = math.exp %54 : vector<8x32xf32>
      %60 = arith.subf %58, %59 : vector<8x32xf32>
      %61 = vector.shape_cast %60 : vector<8x32xf32> to vector<1x8x32xf32>
      %cst_31 = arith.constant dense<0.000000e+00> : vector<1xf32>
      %62 = vector.multi_reduction <add>, %61, %cst_31 [1, 2] : vector<1x8x32xf32> to vector<1xf32>
      %63 = vector.shape_cast %62 : vector<1xf32> to vector<1x1x1xf32>
      %64 = vector.extract %63[0, 0, 0] : f32 from vector<1x1x1xf32>
      %cst_32 = arith.constant 2.560000e+02 : f32
      %65 = arith.divf %64, %cst_32 : f32
      %cst_33 = arith.constant -5.000000e-02 : f32
      %66 = arith.mulf %cst_33, %65 : f32
      %67 = arith.addf %49, %52 : f32
      %68 = arith.addf %67, %66 : f32
      %c0_34 = arith.constant 0 : index
      %c0_35 = arith.constant 0 : index
      %69 = memref.load %arg7[%c0_34, %c0_35] : memref<1x1xf32, #tpu.memory_space<smem>>
      memref.store %68, %arg7[%c0_34, %c0_35] : memref<1x1xf32, #tpu.memory_space<smem>>
    } else {
    }
    return
  }
  func.func @transform_0(%arg0: i32) -> (i32, i32) {
    %c0_i32 = arith.constant 0 : i32
    %c0_i32_0 = arith.constant 0 : i32
    %c0_i32_1 = arith.constant 0 : i32
    return %c0_i32, %c0_i32_0 : i32, i32
  }
  func.func @transform_1(%arg0: i32) -> (i32, i32) {
    %c0_i32 = arith.constant 0 : i32
    %c0_i32_0 = arith.constant 0 : i32
    return %c0_i32, %arg0 : i32, i32
  }
  func.func @transform_2(%arg0: i32) -> (i32, i32) {
    %c0_i32 = arith.constant 0 : i32
    %c0_i32_0 = arith.constant 0 : i32
    return %c0_i32, %arg0 : i32, i32
  }
  func.func @transform_3(%arg0: i32) -> (i32, i32) {
    %c0_i32 = arith.constant 0 : i32
    %c0_i32_0 = arith.constant 0 : i32
    %c0_i32_1 = arith.constant 0 : i32
    return %c0_i32, %c0_i32_0 : i32, i32
  }
  func.func @transform_4(%arg0: i32) -> (i32, i32) {
    %c0_i32 = arith.constant 0 : i32
    %c0_i32_0 = arith.constant 0 : i32
    %c0_i32_1 = arith.constant 0 : i32
    return %c0_i32, %c0_i32_0 : i32, i32
  }
  func.func @transform_5(%arg0: i32) -> (i32, i32) {
    %c0_i32 = arith.constant 0 : i32
    %c0_i32_0 = arith.constant 0 : i32
    %c0_i32_1 = arith.constant 0 : i32
    return %c0_i32, %c0_i32_0 : i32, i32
  }
  func.func @transform_6(%arg0: i32) -> (i32, i32) {
    %c0_i32 = arith.constant 0 : i32
    %c0_i32_0 = arith.constant 0 : i32
    %c0_i32_1 = arith.constant 0 : i32
    return %c0_i32, %c0_i32_0 : i32, i32
  }
}

</mosaic_0001>

<llo_original>
// kernel: tpu_custom_call.1
$region0: #{tpu_custom_call.1}
  #allocation0 [shape = 'u32[]', space=smem, size = 0x4, offset = 0x4, fixed_abs, tag = 'smem constant byte address 0x4 - core index']
  #allocation1 [shape = 'u32[72,128]{1,0:T(1,128)}', space=vmem, size = 0x9000, scoped, tag = 'internal scratch']
  #allocation2 [shape = 'f32[1,1]{1,0:T(1,128)}', space=smem, size = 0x200, scoped, tag = 'scratch operand']
  %s0 = inlined_call_operand.hbm [shape: f32[8,8], index: 0, kind: input, shape index: {}]
  %s1 = inlined_call_operand.hbm [shape: f32[8,1024], index: 1, kind: input, shape index: {}]
  %s2 = inlined_call_operand.hbm [shape: f32[8,1024], index: 2, kind: input, shape index: {}]
  %s3 = inlined_call_operand.hbm [shape: f32[8,32], index: 3, kind: input, shape index: {}]
  %s4 = inlined_call_operand.hbm [shape: f32[8,32], index: 4, kind: input, shape index: {}]
  %s5 = inlined_call_operand.hbm [shape: f32[8,8], index: 5, kind: output, shape index: {0}]
  %s6 = inlined_call_operand.hbm [shape: f32[1,1], index: 6, kind: output, shape index: {1}]
  %7 = xla_tuple %s5, %s6
  %s8 = sld [smem:[#allocation0]]
  $region89: #{tpu_custom_call.1} parent=0
    _
  %s10 = ssub.s32 1, %s8
  %s11 = scalar_select 0, %s10, %s8
  $region1: #{tpu_custom_call.1} parent=0
    #allocation3 [shape = 'u8[4096]{0}', space=vmem, size = 0x1000, scoped, tag = 'input window, operand 0, single buffered']
    #allocation4 [shape = 's32[2]{0}', space=sflag, size = 0x8, scoped, tag = 'scoped memory for tpu_custom_call.1']
    #allocation5 [shape = 's32[2]{0}', space=sflag, size = 0x8, scoped, tag = 'scoped memory for tpu_custom_call.1']
    #allocation6 [shape = 's32[2]{0}', space=sflag, size = 0x8, scoped, tag = 'scoped memory for tpu_custom_call.1']
    #allocation7 [shape = 'u8[16384]{0}', space=vmem, size = 0x4000, scoped, tag = 'input window, operand 1']
    #allocation8 [shape = 's32[2]{0}', space=sflag, size = 0x8, scoped, tag = 'scoped memory for tpu_custom_call.1']
    #allocation9 [shape = 'u8[16384]{0}', space=vmem, size = 0x4000, scoped, tag = 'input window, operand 2']
    #allocation10 [shape = 'u8[4096]{0}', space=vmem, size = 0x1000, scoped, tag = 'input window, operand 3, single buffered']
    #allocation11 [shape = 's32[1]{0}', space=sflag, size = 0x4, scoped, tag = 'scoped memory for tpu_custom_call.1']
    #allocation12 [shape = 'u8[4096]{0}', space=vmem, size = 0x1000, scoped, tag = 'input window, operand 4, single buffered']
    #allocation13 [shape = 'u8[4096]{0}', space=vmem, size = 0x1000, scoped, tag = 'output window, operand 0, single buffered']
    #allocation14 [shape = 'u8[512]{0}', space=smem, size = 0x200, scoped, tag = 'output window, operand 1, single buffered']
    %12 = vsyncpa [#allocation4], 0
    %13 = vsyncpa [#allocation8], 0
    %s14 = scalar_lea.sflag [#allocation8], 1
    %15 = vsyncpa %s14, 0
    %16 = vsyncpa [#allocation11], 0
    %17 = vsyncpa [#allocation5], 0
    %18 = vsyncpa [#allocation6], 0
    loop: start=0, step=1, limit=6
    $region2: #{tpu_custom_call.1} parent=1 // loop_pre_header
      _
    $region3: #{tpu_custom_call.1} parent=1 // loop_header
      %s20 = sphi 0, %s24
      %p21 = scmp.ge.s32.totalorder %s20, 6
      %s28 = sphi 0, %s28
      %s30 = sphi 0, %s28
      %s31 = sphi 0, %s30
      %s45 = sphi 0, %s31
      %s51 = sphi 0, %s53
      %s54 = sphi 0, %s51
      %s55 = sphi 0, %s54
      %s71 = sphi 0, %s55
      %s77 = sphi 0, %s79
      %s80 = sphi 0, %s77
      %s81 = sphi 0, %s80
      %s97 = sphi 0, %s81
      %s101 = sphi 0, %s101
      %s103 = sphi 0, %s101
      %s104 = sphi 0, %s103
      %s118 = sphi 0, %s104
      %s122 = sphi 0, %s122
      %s124 = sphi 0, %s122
      %s125 = sphi 0, %s124
      %s139 = sphi 0, %s125
      %s143 = sphi 0, %s143
      %s145 = sphi 0, %s143
      %s146 = sphi 0, %s145
      %s160 = sphi 0, %s146
      %s164 = sphi 0, %s164
      %s166 = sphi 0, %s164
      %s167 = sphi 0, %s166
      %s181 = sphi 0, %s167
    $region4: #{tpu_custom_call.1} parent=1 // loop_header_branch
      %23 = sbr.rel (%p21) target = $region8
    $region5: #{tpu_custom_call.1} parent=1 // loop_body
      %s25 = ssub.s32 %s20, 1
      %s26 = ssub.s32 %s20, 2
      %s27 = sadd.s32 %s20, 1
      %s29 = sadd.s32 %s28, 1
      %p32 = scmp.eq.s32.totalorder %s20, 3
      %p33 = scmp.ne.s32.totalorder %s28, %s30
      %p34 = scmp.eq.s32.totalorder %s20, 0
      %p35 = por %p33, %p34
      %p36 = scmp.ne.s32.totalorder %s28, %s30
      %p37 = scmp.eq.s32.totalorder %s25, 3
      %p38 = por %p36, %p37
      %p39 = scmp.ne.s32.totalorder %s30, %s31
      %p40 = scmp.eq.s32.totalorder %s25, 0
      %p41 = por %p39, %p40
      %p42 = scmp.ne.s32.totalorder %s30, %s31
      %p43 = scmp.eq.s32.totalorder %s26, 3
      %p44 = por %p42, %p43
      %p46 = scmp.ne.s32.totalorder %s31, %s45
      %p47 = scmp.eq.s32.totalorder %s26, 0
      %p48 = por %p46, %p47
      %s49 = ssub.s32 %s20, %s27
      %p50 = scmp.eq.s32.totalorder %s49, 0
      %s52 = sadd.s32 %s51, 1
      %s53 = scalar_select %p50, %s51, %s52
      %p56 = pneg %p50
      %p57 = scmp.eq.s32.totalorder %s20, 3
      %p58 = por %p56, %p57
      %p59 = scmp.ne.s32.totalorder %s51, %s54
      %p60 = scmp.eq.s32.totalorder %s20, 0
      %p61 = por %p59, %p60
      %p62 = scmp.ne.s32.totalorder %s51, %s54
      %p63 = scmp.eq.s32.totalorder %s25, 3
      %p64 = por %p62, %p63
      %p65 = scmp.ne.s32.totalorder %s54, %s55
      %p66 = scmp.eq.s32.totalorder %s25, 0
      %p67 = por %p65, %p66
      %p68 = scmp.ne.s32.totalorder %s54, %s55
      %p69 = scmp.eq.s32.totalorder %s26, 3
      %p70 = por %p68, %p69
      %p72 = scmp.ne.s32.totalorder %s55, %s71
      %p73 = scmp.eq.s32.totalorder %s26, 0
      %p74 = por %p72, %p73
      %s75 = ssub.s32 %s20, %s27
      %p76 = scmp.eq.s32.totalorder %s75, 0
      %s78 = sadd.s32 %s77, 1
      %s79 = scalar_select %p76, %s77, %s78
      %p82 = pneg %p76
      %p83 = scmp.eq.s32.totalorder %s20, 3
      %p84 = por %p82, %p83
      %p85 = scmp.ne.s32.totalorder %s77, %s80
      %p86 = scmp.eq.s32.totalorder %s20, 0
      %p87 = por %p85, %p86
      %p88 = scmp.ne.s32.totalorder %s77, %s80
      %p89 = scmp.eq.s32.totalorder %s25, 3
      %p90 = por %p88, %p89
      %p91 = scmp.ne.s32.totalorder %s80, %s81
      %p92 = scmp.eq.s32.totalorder %s25, 0
      %p93 = por %p91, %p92
      %p94 = scmp.ne.s32.totalorder %s80, %s81
      %p95 = scmp.eq.s32.totalorder %s26, 3
      %p96 = por %p94, %p95
      %p98 = scmp.ne.s32.totalorder %s81, %s97
      %p99 = scmp.eq.s32.totalorder %s26, 0
      %p100 = por %p98, %p99
      %s102 = sadd.s32 %s101, 1
      %p105 = scmp.eq.s32.totalorder %s20, 3
      %p106 = scmp.ne.s32.totalorder %s101, %s103
      %p107 = scmp.eq.s32.totalorder %s20, 0
      %p108 = por %p106, %p107
      %p109 = scmp.ne.s32.totalorder %s101, %s103
      %p110 = scmp.eq.s32.totalorder %s25, 3
      %p111 = por %p109, %p110
      %p112 = scmp.ne.s32.totalorder %s103, %s104
      %p113 = scmp.eq.s32.totalorder %s25, 0
      %p114 = por %p112, %p113
      %p115 = scmp.ne.s32.totalorder %s103, %s104
      %p116 = scmp.eq.s32.totalorder %s26, 3
      %p117 = por %p115, %p116
      %p119 = scmp.ne.s32.totalorder %s104, %s118
      %p120 = scmp.eq.s32.totalorder %s26, 0
      %p121 = por %p119, %p120
      %s123 = sadd.s32 %s122, 1
      %p126 = scmp.eq.s32.totalorder %s20, 3
      %p127 = scmp.ne.s32.totalorder %s122, %s124
      %p128 = scmp.eq.s32.totalorder %s20, 0
      %p129 = por %p127, %p128
      %p130 = scmp.ne.s32.totalorder %s122, %s124
      %p131 = scmp.eq.s32.totalorder %s25, 3
      %p132 = por %p130, %p131
      %p133 = scmp.ne.s32.totalorder %s124, %s125
      %p134 = scmp.eq.s32.totalorder %s25, 0
      %p135 = por %p133, %p134
      %p136 = scmp.ne.s32.totalorder %s124, %s125
      %p137 = scmp.eq.s32.totalorder %s26, 3
      %p138 = por %p136, %p137
      %p140 = scmp.ne.s32.totalorder %s125, %s139
      %p141 = scmp.eq.s32.totalorder %s26, 0
      %p142 = por %p140, %p141
      %s144 = sadd.s32 %s143, 1
      %p147 = scmp.eq.s32.totalorder %s20, 3
      %p148 = scmp.ne.s32.totalorder %s143, %s145
      %p149 = scmp.eq.s32.totalorder %s20, 0
      %p150 = por %p148, %p149
      %p151 = scmp.ne.s32.totalorder %s143, %s145
      %p152 = scmp.eq.s32.totalorder %s25, 3
      %p153 = por %p151, %p152
      %p154 = scmp.ne.s32.totalorder %s145, %s146
      %p155 = scmp.eq.s32.totalorder %s25, 0
      %p156 = por %p154, %p155
      %p157 = scmp.ne.s32.totalorder %s145, %s146
      %p158 = scmp.eq.s32.totalorder %s26, 3
      %p159 = por %p157, %p158
      %p161 = scmp.ne.s32.totalorder %s146, %s160
      %p162 = scmp.eq.s32.totalorder %s26, 0
      %p163 = por %p161, %p162
      %s165 = sadd.s32 %s164, 1
      %p168 = scmp.eq.s32.totalorder %s20, 3
      %p169 = scmp.ne.s32.totalorder %s164, %s166
      %p170 = scmp.eq.s32.totalorder %s20, 0
      %p171 = por %p169, %p170
      %p172 = scmp.ne.s32.totalorder %s164, %s166
      %p173 = scmp.eq.s32.totalorder %s25, 3
      %p174 = por %p172, %p173
      %p175 = scmp.ne.s32.totalorder %s166, %s167
      %p176 = scmp.eq.s32.totalorder %s25, 0
      %p177 = por %p175, %p176
      %p178 = scmp.ne.s32.totalorder %s166, %s167
      %p179 = scmp.eq.s32.totalorder %s26, 3
      %p180 = por %p178, %p179
      %p182 = scmp.ne.s32.totalorder %s167, %s181
      %p183 = scmp.eq.s32.totalorder %s26, 0
      %p184 = por %p182, %p183
      %p185 = scmp.le.s32.totalorder 1, %s20
      %p186 = scmp.lt.s32.totalorder %s20, 5
      %p187 = pnand %p185, %p186
      %p188 = pneg %p187
      // Predicated region
      $region9: #{tpu_custom_call.1} parent=5 // pred_check
        _
      $region10: #{tpu_custom_call.1} parent=5 // pred_check_branch
        %190 = sbr.rel (%p187) target = $region12
      $region11: #{tpu_custom_call.1} parent=5 // pred_region
        %s191 = ssub.s32 %s20, 1
        // Predicated region
        $region13: #{tpu_custom_call.1} parent=11 // pred_check
          %p192 = pneg %p41
        $region14: #{tpu_custom_call.1} parent=11 // pred_check_branch
          %194 = sbr.rel (%p192) target = $region16
        $region15: #{tpu_custom_call.1} parent=11 // pred_region
          %196 = vsyncadd [#allocation4], 0
          %s198 = sshll.u32 %s0, 4
          %s199 = int_to_ptr.hbm [resolvable:$true] %s198
          %s200 = sshll.u32 [#allocation3], 4
          %s201 = int_to_ptr.vmem [resolvable:$true] %s200
          %203 = dma.hbm_to_vmem [thread:$0]  %s199, 128, %s201, [#allocation4]
        $region16: #{tpu_custom_call.1} parent=11 // pred_fallthru
          _
        // Predicated region
        $region17: #{tpu_custom_call.1} parent=11 // pred_check
          %p204 = pneg %p114
        $region18: #{tpu_custom_call.1} parent=11 // pred_check_branch
          %206 = sbr.rel (%p204) target = $region20
        $region19: #{tpu_custom_call.1} parent=11 // pred_region
          %208 = vsyncadd [#allocation11], 0
          %s210 = sshll.u32 %s3, 4
          %s211 = int_to_ptr.hbm [resolvable:$true] %s210
          %s212 = sshll.u32 [#allocation10], 4
          %s213 = int_to_ptr.vmem [resolvable:$true] %s212
          %215 = dma.hbm_to_vmem [thread:$0]  %s211, 128, %s213, [#allocation11]
        $region20: #{tpu_custom_call.1} parent=11 // pred_fallthru
          _
        // Predicated region
        $region21: #{tpu_custom_call.1} parent=11 // pred_check
          %p216 = pneg %p135
        $region22: #{tpu_custom_call.1} parent=11 // pred_check_branch
          %218 = sbr.rel (%p216) target = $region24
        $region23: #{tpu_custom_call.1} parent=11 // pred_region
          %220 = vsyncadd [#allocation11], 0
          %s222 = sshll.u32 %s4, 4
          %s223 = int_to_ptr.hbm [resolvable:$true] %s222
          %s224 = sshll.u32 [#allocation12], 4
          %s225 = int_to_ptr.vmem [resolvable:$true] %s224
          %227 = dma.hbm_to_vmem [thread:$0]  %s223, 128, %s225, [#allocation11]
        $region24: #{tpu_custom_call.1} parent=11 // pred_fallthru
          _
      $region12: #{tpu_custom_call.1} parent=5 // pred_fallthru
        _
      %p228 = scmp.lt.s32.totalorder %s20, 4
      // Predicated region
      $region25: #{tpu_custom_call.1} parent=5 // pred_check
        %p229 = pneg %p228
      $region26: #{tpu_custom_call.1} parent=5 // pred_check_branch
        %231 = sbr.rel (%p229) target = $region28
      $region27: #{tpu_custom_call.1} parent=5 // pred_region
        // Predicated region
        $region29: #{tpu_custom_call.1} parent=27 // pred_check
          %p232 = pneg %p61
        $region30: #{tpu_custom_call.1} parent=27 // pred_check_branch
          %234 = sbr.rel (%p232) target = $region32
        $region31: #{tpu_custom_call.1} parent=27 // pred_region
          %s235 = sand.u32 %s20, 1
          %s236 = scalar_lea.sflag [#allocation8], %s235
          %s237 = sand.u32 %s51, 1
          %s238 = smul.addr %s237, 16
          %s239 = scalar_lea.vmem [#allocation7], %s238
          %s240 = smul.u32 2, %s20
          %242 = vsyncadd %s236, 0
          %s243 = smul.addr %s240, 8
          %s244 = scalar_lea.hbm %s1, %s243
          %s246 = sshll.u32 %s244, 4
          %s247 = int_to_ptr.hbm [resolvable:$true] %s246
          %s248 = sshll.u32 %s239, 4
          %s249 = int_to_ptr.vmem [resolvable:$true] %s248
          %251 = dma.hbm_to_vmem [thread:$0]  %s247, 256, %s249, %s236
        $region32: #{tpu_custom_call.1} parent=27 // pred_fallthru
          _
        // Predicated region
        $region33: #{tpu_custom_call.1} parent=27 // pred_check
          %p252 = pneg %p87
        $region34: #{tpu_custom_call.1} parent=27 // pred_check_branch
          %254 = sbr.rel (%p252) target = $region36
        $region35: #{tpu_custom_call.1} parent=27 // pred_region
          %s255 = sand.u32 %s20, 1
          %s256 = scalar_lea.sflag [#allocation8], %s255
          %s257 = sand.u32 %s77, 1
          %s258 = smul.addr %s257, 16
          %s259 = scalar_lea.vmem [#allocation9], %s258
          %s260 = smul.u32 2, %s20
          %262 = vsyncadd %s256, 0
          %s263 = smul.addr %s260, 8
          %s264 = scalar_lea.hbm %s2, %s263
          %s266 = sshll.u32 %s264, 4
          %s267 = int_to_ptr.hbm [resolvable:$true] %s266
          %s268 = sshll.u32 %s259, 4
          %s269 = int_to_ptr.vmem [resolvable:$true] %s268
          %271 = dma.hbm_to_vmem [thread:$0]  %s267, 256, %s269, %s256
        $region36: #{tpu_custom_call.1} parent=27 // pred_fallthru
          _
      $region28: #{tpu_custom_call.1} parent=5 // pred_fallthru
        _
      %p272 = scmp.le.s32.totalorder 1, %s20
      %p273 = scmp.lt.s32.totalorder %s20, 5
      %p274 = pnand %p272, %p273
      %p275 = pneg %p274
      // Predicated region
      $region37: #{tpu_custom_call.1} parent=5 // pred_check
        _
      $region38: #{tpu_custom_call.1} parent=5 // pred_check_branch
        %277 = sbr.rel (%p274) target = $region40
      $region39: #{tpu_custom_call.1} parent=5 // pred_region
        %s278 = ssub.s32 %s20, 1
        // Predicated region
        $region41: #{tpu_custom_call.1} parent=39 // pred_check
          %p279 = pneg %p41
        $region42: #{tpu_custom_call.1} parent=39 // pred_check_branch
          %281 = sbr.rel (%p279) target = $region44
        $region43: #{tpu_custom_call.1} parent=39 // pred_region
          %283 = dma.done [#allocation4], 128
        $region44: #{tpu_custom_call.1} parent=39 // pred_fallthru
          _
        %s284 = sand.u32 %s25, 1
        %s285 = scalar_lea.sflag [#allocation8], %s284
        %s286 = sand.u32 %s54, 1
        %s287 = smul.addr %s286, 16
        %s288 = scalar_lea.vmem [#allocation7], %s287
        // Predicated region
        $region45: #{tpu_custom_call.1} parent=39 // pred_check
          %p289 = pneg %p67
        $region46: #{tpu_custom_call.1} parent=39 // pred_check_branch
          %291 = sbr.rel (%p289) target = $region48
        $region47: #{tpu_custom_call.1} parent=39 // pred_region
          %293 = dma.done %s285, 256
        $region48: #{tpu_custom_call.1} parent=39 // pred_fallthru
          _
        %s294 = sand.u32 %s25, 1
        %s295 = scalar_lea.sflag [#allocation8], %s294
        %s296 = sand.u32 %s80, 1
        %s297 = smul.addr %s296, 16
        %s298 = scalar_lea.vmem [#allocation9], %s297
        // Predicated region
        $region49: #{tpu_custom_call.1} parent=39 // pred_check
          %p299 = pneg %p93
        $region50: #{tpu_custom_call.1} parent=39 // pred_check_branch
          %301 = sbr.rel (%p299) target = $region52
        $region51: #{tpu_custom_call.1} parent=39 // pred_region
          %303 = dma.done %s295, 256
        $region52: #{tpu_custom_call.1} parent=39 // pred_fallthru
          _
        // Predicated region
        $region53: #{tpu_custom_call.1} parent=39 // pred_check
          %p304 = pneg %p114
        $region54: #{tpu_custom_call.1} parent=39 // pred_check_branch
          %306 = sbr.rel (%p304) target = $region56
        $region55: #{tpu_custom_call.1} parent=39 // pred_region
          %308 = dma.done [#allocation11], 128
        $region56: #{tpu_custom_call.1} parent=39 // pred_fallthru
          _
        // Predicated region
        $region57: #{tpu_custom_call.1} parent=39 // pred_check
          %p309 = pneg %p135
        $region58: #{tpu_custom_call.1} parent=39 // pred_check_branch
          %311 = sbr.rel (%p309) target = $region60
        $region59: #{tpu_custom_call.1} parent=39 // pred_region
          %313 = dma.done [#allocation11], 128
        $region60: #{tpu_custom_call.1} parent=39 // pred_fallthru
          _
        %p314 = pneg %p41
        %p315 = pneg %p38
        %s316 = sand.u32 %s25, 1
        %s317 = scalar_lea.sflag [#allocation8], %s316
        %s318 = sand.u32 %s54, 1
        %s319 = smul.addr %s318, 16
        %s320 = scalar_lea.vmem [#allocation7], %s319
        %p321 = pneg %p67
        %p322 = pneg %p64
        %s323 = sand.u32 %s25, 1
        %s324 = scalar_lea.sflag [#allocation8], %s323
        %s325 = sand.u32 %s80, 1
        %s326 = smul.addr %s325, 16
        %s327 = scalar_lea.vmem [#allocation9], %s326
        %p328 = pneg %p93
        %p329 = pneg %p90
        %p330 = pneg %p114
        %p331 = pneg %p111
        %p332 = pneg %p135
        %p333 = pneg %p132
        %p334 = pneg %p156
        %p335 = pneg %p153
        %p336 = pneg %p177
        %p337 = pneg %p174
        %s338 = smul.u32 2, %s25
        %s339 = smul.u32 2, %s25
        %p340 = scmp.eq.s32.totalorder %s25, 0
        // Predicated region
        $region61: #{tpu_custom_call.1} parent=39 // pred_check
          %p341 = pneg %p340
        $region62: #{tpu_custom_call.1} parent=39 // pred_check_branch
          %343 = sbr.rel (%p341) target = $region64
        $region63: #{tpu_custom_call.1} parent=39 // pred_region
          %s344 = scalar_lea.smem [#allocation2], 0
          %345 = sst [smem:[%s344]] 0.0
        $region64: #{tpu_custom_call.1} parent=39 // pred_fallthru
          _
        %v346 = vld [vmem:[%s288] sm:$0xff]
        %v347 = vld [vmem:[%s288 + $0x8] sm:$0xff]
        %v348 = vld [vmem:[%s298] sm:$0xff]
        %v349 = vld [vmem:[%s298 + $0x8] sm:$0xff]
        %v350 = vsub.f32 %v346, %v348
        %v351 = vsub.f32 %v347, %v349
        %s352 = sld [smem:[#allocation2]]
        %v353 = vmul.f32 %v350, %v350
        %v354 = vmul.f32 %v351, %v351
        %v355 = vadd.f32 %v353, %v354
        %356 = vadd.xlane.f32.xlu0 %v355
        %v357 = vpop.xlane.xlu0 %356
        %v358 = vrot.slane %v357, 4
        %v359 = vadd.f32 %v357, %v358
        %v360 = vrot.slane %v359, 2
        %v361 = vadd.f32 %v359, %v360
        %v362 = vrot.slane %v361, 1
        %v363 = vadd.f32 %v361, %v362
        %s364 = vtos %v363
        %s365 = sadd.f32 %s352, %s364
        %s366 = scalar_lea.smem [#allocation2], 0
        %367 = sst [smem:[%s366]] %s365
        %p368 = scmp.eq.s32.totalorder %s25, 3
        // Predicated region
        $region65: #{tpu_custom_call.1} parent=39 // pred_check
          %p369 = pneg %p368
        $region66: #{tpu_custom_call.1} parent=39 // pred_check_branch
          %371 = sbr.rel (%p369) target = $region68
        $region67: #{tpu_custom_call.1} parent=39 // pred_region
          %v372 = vld [vmem:[#allocation3] sm:$0xff]
          %v373 = vmul.f32 %v372, %v372
          %v374 = vsub.f32 1.0, %v372
          %v375 = vmax.f32 %v374, 1e-08
          %v376 = vmul.f32 %v375, %v375
          %v377 = vadd.f32 %v373, %v376
          %v378 = vrcp.pop %v377
          %v379 = vmul.f32 %v377, %v378
          %v380 = vsub.f32 1.0, %v379
          %v381 = vmul.f32 %v378, %v380
          %v382 = vadd.f32 %v378, %v381
          %vm383 = vweird.f32 %v377
          %vm384 = vweird.f32 %v378
          %vm385 = vmor %vm383, %vm384
          %v386 = vsel %vm385, %v378, %v382
          %v387 = vand.u32 2147483647, %v377
          %vm388 = vcmp.eq.f32.partialorder %v387, 8.507059e+37
          %v389 = vand.u32 %v377, 2147483648
          %v390 = vor.u32 1.1754944e-38, %v389
          %v391 = vsel %vm388, %v390, %v386
          %v392 = vmul.f32 %v376, %v391
          %v393 = vsub.f32 1.0, %v392
          %394 = vxpose.xlu0.b32.start [1/16] %v392, 128
          %395 = vxpose.xlu0.b32.cont [2/16] 0.0, 128
          %396 = vxpose.xlu0.b32.cont [3/16] 0.0, 128
          %397 = vxpose.xlu0.b32.cont [4/16] 0.0, 128
          %398 = vxpose.xlu0.b32.cont [5/16] 0.0, 128
          %399 = vxpose.xlu0.b32.cont [6/16] 0.0, 128
          %400 = vxpose.xlu0.b32.cont [7/16] 0.0, 128
          %401 = vxpose.xlu0.b32.cont [8/16] 0.0, 128
          %402 = vxpose.xlu0.b32.cont [9/16] 0.0, 128
          %403 = vxpose.xlu0.b32.cont [10/16] 0.0, 128
          %404 = vxpose.xlu0.b32.cont [11/16] 0.0, 128
          %405 = vxpose.xlu0.b32.cont [12/16] 0.0, 128
          %406 = vxpose.xlu0.b32.cont [13/16] 0.0, 128
          %407 = vxpose.xlu0.b32.cont [14/16] 0.0, 128
          %408 = vxpose.xlu0.b32.cont [15/16] 0.0, 128
          %409 = vxpose.xlu0.b32.end [16/16] 0.0, 128
          %v410 = vpop.trf.xlu0
          %v411 = vpop.trf.xlu0
          %v412 = vpop.trf.xlu0
          %v413 = vpop.trf.xlu0
          %v414 = vpop.trf.xlu0
          %v415 = vpop.trf.xlu0
          %v416 = vpop.trf.xlu0
          %v417 = vpop.trf.xlu0
          %v418 = vpop.trf.xlu0
          %v419 = vpop.trf.xlu0
          %v420 = vpop.trf.xlu0
          %v421 = vpop.trf.xlu0
          %v422 = vpop.trf.xlu0
          %v423 = vpop.trf.xlu0
          %v424 = vpop.trf.xlu0
          %v425 = vpop.trf.xlu0
          %v426 = vmax.f32 %v392, %v410
          %vm427 = vcmask 64512
          %428 = vst.msk [vmem:[#allocation13] sm:$0xff] %vm427, %v426
          %v429 = vmul.f32 %v426, %v373
          %v430 = vsub.f32 1.0, %v426
          %v431 = vmul.f32 %v430, %v376
          %v432 = vadd.f32 %v429, %v431
          %v433 = vsel %vm427, %v432, 0.0
          %434 = vadd.xlane.f32.xlu0 %v433
          %v435 = vpop.xlane.xlu0 %434
          %v436 = vrot.slane %v435, 4
          %v437 = vadd.f32 %v435, %v436
          %v438 = vrot.slane %v437, 2
          %v439 = vadd.f32 %v437, %v438
          %v440 = vrot.slane %v439, 1
          %v441 = vadd.f32 %v439, %v440
          %s442 = vtos %v441
          %v443 = vrcp.pop 64.0
          %v444 = vmul.f32 64.0, %v443
          %v445 = vsub.f32 1.0, %v444
          %v446 = vmul.f32 %v443, %v445
          %v447 = vadd.f32 %v443, %v446
          %vm448 = vweird.f32 %v443
          %v449 = vsel %vm448, %v443, %v447
          %s450 = vtos %v449
          %s451 = smul.f32 %s442, %s450
          %v452 = vmul.f32 %v393, %v393
          %v453 = vsel %vm427, %v452, 0.0
          %454 = vadd.xlane.f32.xlu0 %v453
          %v455 = vpop.xlane.xlu0 %454
          %v456 = vrot.slane %v455, 4
          %v457 = vadd.f32 %v455, %v456
          %v458 = vrot.slane %v457, 2
          %v459 = vadd.f32 %v457, %v458
          %v460 = vrot.slane %v459, 1
          %v461 = vadd.f32 %v459, %v460
          %s462 = vtos %v461
          %v463 = vstv %s462
          %v464 = vrsqrt.pop %v463
          %v465 = vmul.f32 %v464, %v463
          %v466 = vmul.f32 %v465, %v464
          %v467 = vmul.f32 0.5, %v466
          %v468 = vsub.f32 1.5, %v467
          %v469 = vmul.f32 %v464, %v468
          %v470 = vmul.f32 %v463, %v469
          %vm471 = vcmp.eq.f32.partialorder %v463, inf
          %v472 = vsel %vm471, %v463, %v470
          %vm473 = vcmp.eq.f32.partialorder %v463, 0.0
          %v474 = vand.u32 %v463, 2147483648
          %v475 = vsel %vm473, %v474, %v472
          %s476 = vtos %v475
          %s477 = smul.f32 %s476, 1e-05
          %s478 = sadd.f32 %s451, %s477
          %s479 = sld [smem:[#allocation2]]
          %v480 = vrcp.pop 8.0
          %v481 = vmul.f32 8.0, %v480
          %v482 = vsub.f32 1.0, %v481
          %v483 = vmul.f32 %v480, %v482
          %v484 = vadd.f32 %v480, %v483
          %vm485 = vweird.f32 %v480
          %v486 = vsel %vm485, %v480, %v484
          %s487 = vtos %v486
          %s488 = smul.f32 %s479, %s487
          %v489 = vld [vmem:[#allocation10] sm:$0xff]
          %v490 = vld [vmem:[#allocation12] sm:$0xff]
          %v491 = vadd.f32 %v490, 1.0
          %v492 = vmul.f32 %v489, %v489
          %v493 = vsub.f32 %v491, %v492
          %v494 = vmul.f32 %v490, 1.442695
          %v495 = vpow.pop %v494
          %v496 = vsub.f32 %v493, %v495
          %vm497 = vcmask 261120
          %v498 = vsel %vm497, %v496, 0.0
          %499 = vadd.xlane.f32.xlu0 %v498
          %v500 = vpop.xlane.xlu0 %499
          %v501 = vrot.slane %v500, 4
          %v502 = vadd.f32 %v500, %v501
          %v503 = vrot.slane %v502, 2
          %v504 = vadd.f32 %v502, %v503
          %v505 = vrot.slane %v504, 1
          %v506 = vadd.f32 %v504, %v505
          %s507 = vtos %v506
          %v508 = vrcp.pop 256.0
          %v509 = vmul.f32 256.0, %v508
          %v510 = vsub.f32 1.0, %v509
          %v511 = vmul.f32 %v508, %v510
          %v512 = vadd.f32 %v508, %v511
          %vm513 = vweird.f32 %v508
          %v514 = vsel %vm513, %v508, %v512
          %s515 = vtos %v514
          %s516 = smul.f32 %s507, %s515
          %s517 = smul.f32 %s516, -0.05
          %s518 = sadd.f32 %s478, %s488
          %s519 = sadd.f32 %s518, %s517
          %s520 = scalar_lea.smem [#allocation14], 0
          %521 = sst [smem:[%s520]] %s519
        $region68: #{tpu_custom_call.1} parent=39 // pred_fallthru
          _
        // Predicated region
        $region69: #{tpu_custom_call.1} parent=39 // pred_check
          %p522 = pneg %p153
        $region70: #{tpu_custom_call.1} parent=39 // pred_check_branch
          %524 = sbr.rel (%p522) target = $region72
        $region71: #{tpu_custom_call.1} parent=39 // pred_region
          %526 = vsyncadd [#allocation5], 0
          %s528 = sshll.u32 [#allocation13], 4
          %s529 = int_to_ptr.vmem [resolvable:$true] %s528
          %s530 = sshll.u32 %s5, 4
          %s531 = int_to_ptr.hbm [resolvable:$true] %s530
          %533 = dma.vmem_to_hbm [thread:$0]  %s529, 128, %s531, [#allocation5]
        $region72: #{tpu_custom_call.1} parent=39 // pred_fallthru
          _
        // Predicated region
        $region73: #{tpu_custom_call.1} parent=39 // pred_check
          %p534 = pneg %p174
        $region74: #{tpu_custom_call.1} parent=39 // pred_check_branch
          %536 = sbr.rel (%p534) target = $region76
        $region75: #{tpu_custom_call.1} parent=39 // pred_region
          %538 = vsyncadd [#allocation6], 0
          %s540 = sshll.u32 %s6, 4
          %s541 = int_to_ptr.hbm [resolvable:$true] %s540
          %543 = dma.smem_to_hbm [#allocation14], 16, %s541, [#allocation6]
        $region76: #{tpu_custom_call.1} parent=39 // pred_fallthru
          _
        // Predicated region
        $region77: #{tpu_custom_call.1} parent=39 // pred_check
          %p544 = pneg %p153
        $region78: #{tpu_custom_call.1} parent=39 // pred_check_branch
          %546 = sbr.rel (%p544) target = $region80
        $region79: #{tpu_custom_call.1} parent=39 // pred_region
          %548 = dma.done [#allocation5], 128
        $region80: #{tpu_custom_call.1} parent=39 // pred_fallthru
          _
        // Predicated region
        $region81: #{tpu_custom_call.1} parent=39 // pred_check
          %p549 = pneg %p174
        $region82: #{tpu_custom_call.1} parent=39 // pred_check_branch
          %551 = sbr.rel (%p549) target = $region84
        $region83: #{tpu_custom_call.1} parent=39 // pred_region
          %553 = dma.done [#allocation6], 16
        $region84: #{tpu_custom_call.1} parent=39 // pred_fallthru
          _
        %554 = sfence
      $region40: #{tpu_custom_call.1} parent=5 // pred_fallthru
        _
      %p555 = scmp.le.s32.totalorder 2, %s20
      // Predicated region
      $region85: #{tpu_custom_call.1} parent=5 // pred_check
        %p556 = pneg %p555
      $region86: #{tpu_custom_call.1} parent=5 // pred_check_branch
        %558 = sbr.rel (%p556) target = $region88
      $region87: #{tpu_custom_call.1} parent=5 // pred_region
        %s559 = ssub.s32 %s20, 2
      $region88: #{tpu_custom_call.1} parent=5 // pred_fallthru
        _
    $region6: #{tpu_custom_call.1} parent=1 // loop_footer
      %s24 = sadd.s32 1, %s20
    $region7: #{tpu_custom_call.1} parent=1 // loop_footer_branch
      %19 = sbr.rel target = $region3
    $region8: #{tpu_custom_call.1} parent=1 // loop_exit
      _
    %560 = vsyncpa [#allocation4], 1
    %s561 = scalar_lea.sflag [#allocation4], 1
    %562 = vsyncpa %s561, 1
    %563 = vsyncpa [#allocation8], 1
    %s564 = scalar_lea.sflag [#allocation8], 1
    %565 = vsyncpa %s564, 1
    %566 = vsyncpa [#allocation11], 1
    %567 = vsyncpa [#allocation5], 1
    %s568 = scalar_lea.sflag [#allocation5], 1
    %569 = vsyncpa %s568, 1
    %570 = vsyncpa [#allocation6], 1
    %s571 = scalar_lea.sflag [#allocation6], 1
    %572 = vsyncpa %s571, 1

</llo_original>
